<compile_context>
chip_gen: v7x
topology: tpu7x:2x2x1
jax: 0.10.0
libtpu: 0.0.40
codegen_flags: <defaults>
</compile_context>

<pallas_src>
import jax
import jax.numpy as jnp
from jax.experimental import pallas as pl
from jax.experimental.pallas import tpu as pltpu


def _make_kernel(weight_normalization: bool):
    def kernel(q_ref,    # (BB, E)        input dtype
               k_ref,    # (BB, T, E)     input dtype
               kl_ref,   # (BB, 1)        int32
               w1_ref,   # (3E, H1)       combined [q | k | q*k] weight
               b1_ref,   # (1, H1)        f32
               w2_ref,   # (H1, H2)       f32
               b2_ref,   # (1, H2)        f32
               w3_ref,   # (1, 1, H2)     f32 (W3 row)
               b3_ref,   # (1, 1, 1)      f32
               o_ref):   # (BB, E)        input dtype
        BB, T, E = k_ref.shape
        H2 = w2_ref.shape[1]

        q = q_ref[...]                                   # (BB, E)
        k = k_ref[...]                                   # (BB, T, E)

        # Flatten (BB, T) -> rows so the whole block runs through the MXU as one
        # fat matmul (M = BB*T).
        kf = k.reshape(BB * T, E)
        qf = jnp.broadcast_to(q[:, None, :], (BB, T, E)).reshape(BB * T, E)

        # Single layer-1 MXU pass: concat([q,k,q-k,q*k]) @ W1 == [q,k,q*k] @ W1'
        # with W1' pre-combined in the wrapper.
        att = jnp.concatenate([qf, kf, qf * kf], axis=-1)            # (BB*T, 3E)

        z1 = jnp.dot(att, w1_ref[...],
                     preferred_element_type=jnp.float32) + b1_ref[...]
        h1 = jax.nn.sigmoid(z1)                                       # (BB*T, H1) f32
        z2 = jnp.dot(h1, w2_ref[...],
                     preferred_element_type=jnp.float32) + b2_ref[...]
        h2 = jax.nn.sigmoid(z2)                                       # (BB*T, H2) f32

        # (H2 -> 1) projection on VPU/XLU instead of a 1-output-lane MXU matmul.
        h2_3d = h2.reshape(BB, T, H2)
        score = jnp.sum(h2_3d * w3_ref[...], axis=-1, keepdims=True) + b3_ref[...]
        # score: (BB, T, 1) f32

        # Mask padded sequence positions: t < keys_length[b].
        t_idx = jax.lax.broadcasted_iota(jnp.int32, (BB, T, 1), 1)
        kl = kl_ref[...]                                              # (BB, 1) int32
        valid = t_idx < kl[:, :, None]                                # (BB, T, 1)

        if weight_normalization:
            neg = jnp.full_like(score, -(2.0 ** 32) + 1.0)
            s = jnp.where(valid, score, neg)
            s = s - jnp.max(s, axis=1, keepdims=True)
            p = jnp.exp(s)
            w = p / jnp.sum(p, axis=1, keepdims=True)
        else:
            w = jnp.where(valid, score, jnp.zeros_like(score))        # (BB, T, 1)

        # TODO(synk): return_score=True path (emit (B,1,T) weights) not wired up;
        # default config pools over keys below.
        pooled = jnp.sum(w * k, axis=1)                               # (BB, E) f32
        o_ref[...] = pooled.astype(o_ref.dtype)

    return kernel


def attention_sequence_pooling(query, keys, keys_length,
                               W1, b1, W2, b2, W3, b3,
                               *, weight_normalization=False,
                               block_batch=64):
    """Fused DIN attention sequence pooling.

    query:        (B, 1, E)
    keys:         (B, T, E)
    keys_length:  (B, 1) int
    W1: (4E, H1), b1: (H1,), W2: (H1, H2), b2: (H2,), W3: (H2, 1), b3: (1,)
    returns:      (B, 1, E) in keys.dtype
    """
    B, T, E = keys.shape
    H1 = W1.shape[1]
    H2 = W2.shape[1]

    # Block of batch rows per grid step.  Sized so that the f32 intermediates
    # (~BB*T*(3E+H1+H2)*4 bytes) plus double-buffered keys stay well inside VMEM
    # (64 MiB on v7x, 128 MiB on v5e/v6e).  For B < block_batch the single block
    # simply covers the whole batch.
    BB = min(block_batch, B)

    # Fold the 4E concat into the first linear layer (exact algebraic identity):
    #   [q,k,q-k,q*k] @ W1 == [q,k,q*k] @ [[W1a+W1c],[W1b-W1c],[W1d]]
    W1f = W1.astype(jnp.float32)
    w1q = W1f[0:E] + W1f[2 * E:3 * E]          # acts on q
    w1k = W1f[E:2 * E] - W1f[2 * E:3 * E]      # acts on k
    w1p = W1f[3 * E:4 * E]                     # acts on q*k
    w1c = jnp.concatenate([w1q, w1k, w1p], axis=0).astype(keys.dtype)   # (3E, H1)

    b1r = b1.reshape(1, H1).astype(jnp.float32)
    w2c = W2.astype(jnp.float32)
    b2r = b2.reshape(1, H2).astype(jnp.float32)
    w3r = W3.reshape(1, 1, H2).astype(jnp.float32)
    b3r = b3.reshape(1, 1, 1).astype(jnp.float32)

    q2 = query.reshape(B, E)                   # keep input dtype (no upcast)
    kl = keys_length.reshape(B, 1).astype(jnp.int32)

    const2 = lambda g: (0, 0)
    const3 = lambda g: (0, 0, 0)

    out = pl.pallas_call(
        _make_kernel(weight_normalization),
        out_shape=jax.ShapeDtypeStruct((B, E), keys.dtype),
        grid=(pl.cdiv(B, BB),),
        in_specs=[
            pl.BlockSpec((BB, E), lambda g: (g, 0)),          # query
            pl.BlockSpec((BB, T, E), lambda g: (g, 0, 0)),    # keys
            pl.BlockSpec((BB, 1), lambda g: (g, 0)),          # keys_length
            pl.BlockSpec((3 * E, H1), const2),                # W1 (combined)
            pl.BlockSpec((1, H1), const2),                    # b1
            pl.BlockSpec((H1, H2), const2),                   # W2
            pl.BlockSpec((1, H2), const2),                    # b2
            pl.BlockSpec((1, 1, H2), const3),                 # W3 row
            pl.BlockSpec((1, 1, 1), const3),                  # b3
        ],
        out_specs=pl.BlockSpec((BB, E), lambda g: (g, 0)),
        compiler_params=pltpu.CompilerParams(
            dimension_semantics=("parallel",),
            vmem_limit_bytes=48 * 1024 * 1024,
        ),
    )(q2, keys, kl, w1c, b1r, w2c, b2r, w3r, b3r)

    return out.reshape(B, 1, E)


def _reference(query, keys, keys_length, W1, b1, W2, b2, W3, b3,
               weight_normalization=False):
    """Pure-JAX mirror of the PyTorch AttentionSequencePoolingLayer forward."""
    B, T, E = keys.shape
    queries = jnp.broadcast_to(query, (B, T, E))
    att_in = jnp.concatenate(
        [queries, keys, queries - keys, queries * keys], axis=-1)       # (B,T,4E)
    h1 = jax.nn.sigmoid(att_in @ W1 + b1)
    h2 = jax.nn.sigmoid(h1 @ W2 + b2)
    score = h2 @ W3 + b3                                                # (B,T,1)
    outputs = jnp.transpose(score, (0, 2, 1))                           # (B,1,T)
    mask = (jnp.arange(T)[None, :] < keys_length.reshape(B, 1))[:, None, :]
    if weight_normalization:
        pad = jnp.full_like(outputs, -(2.0 ** 32) + 1.0)
        outputs = jnp.where(mask, outputs, pad)
        outputs = jax.nn.softmax(outputs, axis=-1)
    else:
        outputs = jnp.where(mask, outputs, jnp.zeros_like(outputs))
    return jnp.matmul(outputs, keys)                                    # (B,1,E)


if __name__ == "__main__":
    key = jax.random.PRNGKey(0)
    B, T, E = 16, 8, 4           # embedding_dim=4 (module default), short behaviour seq
    H1, H2 = 80, 40              # att_hidden_units default (80, 40)

    ks = jax.random.split(key, 9)
    query = jax.random.normal(ks[0], (B, 1, E), dtype=jnp.float32)
    keys = jax.random.normal(ks[1], (B, T, E), dtype=jnp.float32)
    keys_length = jax.random.randint(ks[2], (B, 1), 1, T + 1).astype(jnp.int32)

    W1 = 0.1 * jax.random.normal(ks[3], (4 * E, H1), dtype=jnp.float32)
    b1 = 0.1 * jax.random.normal(ks[4], (H1,), dtype=jnp.float32)
    W2 = 0.1 * jax.random.normal(ks[5], (H1, H2), dtype=jnp.float32)
    b2 = 0.1 * jax.random.normal(ks[6], (H2,), dtype=jnp.float32)
    W3 = 0.1 * jax.random.normal(ks[7], (H2, 1), dtype=jnp.float32)
    b3 = 0.1 * jax.random.normal(ks[8], (1,), dtype=jnp.float32)

    for wn in (False, True):
        out = attention_sequence_pooling(query, keys, keys_length,
                                         W1, b1, W2, b2, W3, b3,
                                         weight_normalization=wn,
                                         block_batch=8)   # grid of 2 batch blocks
        jax.block_until_ready(out)
        ref = _reference(query, keys, keys_length, W1, b1, W2, b2, W3, b3,
                         weight_normalization=wn)
        assert out.shape == (B, 1, E) and out.dtype == keys.dtype
        err = float(jnp.max(jnp.abs(out - ref)))
        assert err < 1e-4, f"weight_normalization={wn}: max abs err {err}"

    print("KERNEL_OK")
</pallas_src>

<mosaic_0001>
module attributes {stable_mosaic.version = 11 : i64} {
  func.func @kernel(%arg0: i32, %arg1: memref<8x4xf32, #tpu.memory_space<vmem>>, %arg2: memref<8x8x4xf32, #tpu.memory_space<vmem>>, %arg3: memref<8x1xi32, #tpu.memory_space<vmem>>, %arg4: memref<12x80xf32, #tpu.memory_space<vmem>>, %arg5: memref<1x80xf32, #tpu.memory_space<vmem>>, %arg6: memref<80x40xf32, #tpu.memory_space<vmem>>, %arg7: memref<1x40xf32, #tpu.memory_space<vmem>>, %arg8: memref<1x1x40xf32, #tpu.memory_space<vmem>>, %arg9: memref<1x1x1xf32, #tpu.memory_space<vmem>>, %arg10: memref<8x4xf32, #tpu.memory_space<vmem>>) attributes {dimension_semantics = [#tpu.dimension_semantics<parallel>], iteration_bounds = array<i64: 2>, scalar_prefetch = 0 : i64, scratch_operands = 0 : i64, tpu.core_type = #tpu.core_type<tc>, window_params = [{transform_indices = @transform_0, window_bounds = array<i64: 8, 4>}, {transform_indices = @transform_1, window_bounds = array<i64: 8, 8, 4>}, {transform_indices = @transform_2, window_bounds = array<i64: 8, 1>}, {pipeline_mode = #tpu.pipeline_mode<synchronous>, transform_indices = @transform_3, window_bounds = array<i64: 12, 80>}, {pipeline_mode = #tpu.pipeline_mode<synchronous>, transform_indices = @transform_4, window_bounds = array<i64: 1, 80>}, {pipeline_mode = #tpu.pipeline_mode<synchronous>, transform_indices = @transform_5, window_bounds = array<i64: 80, 40>}, {pipeline_mode = #tpu.pipeline_mode<synchronous>, transform_indices = @transform_6, window_bounds = array<i64: 1, 40>}, {pipeline_mode = #tpu.pipeline_mode<synchronous>, transform_indices = @transform_7, window_bounds = array<i64: 1, 1, 40>}, {pipeline_mode = #tpu.pipeline_mode<synchronous>, transform_indices = @transform_8, window_bounds = array<i64: 1, 1, 1>}, {transform_indices = @transform_9, window_bounds = array<i64: 8, 4>}]} {
    %c0 = arith.constant 0 : index
    %c0_0 = arith.constant 0 : index
    %0 = vector.load %arg1[%c0, %c0_0] : memref<8x4xf32, #tpu.memory_space<vmem>>, vector<8x4xf32>
    %c0_1 = arith.constant 0 : index
    %c0_2 = arith.constant 0 : index
    %c0_3 = arith.constant 0 : index
    %1 = vector.load %arg2[%c0_1, %c0_2, %c0_3] : memref<8x8x4xf32, #tpu.memory_space<vmem>>, vector<8x8x4xf32>
    %2 = vector.shape_cast %1 : vector<8x8x4xf32> to vector<64x4xf32>
    %3 = vector.shape_cast %0 : vector<8x4xf32> to vector<8x1x4xf32>
    %4 = vector.shape_cast %3 : vector<8x1x4xf32> to vector<8x1x4xf32>
    %5 = vector.broadcast %4 : vector<8x1x4xf32> to vector<8x8x4xf32>
    %6 = vector.shape_cast %5 : vector<8x8x4xf32> to vector<64x4xf32>
    %7 = arith.mulf %6, %2 : vector<64x4xf32>
    %8 = tpu.concatenate %6, %2, %7 in 1 : vector<64x4xf32>, vector<64x4xf32>, vector<64x4xf32> -> vector<64x12xf32>
    %c0_4 = arith.constant 0 : index
    %c0_5 = arith.constant 0 : index
    %9 = vector.load %arg4[%c0_4, %c0_5] : memref<12x80xf32, #tpu.memory_space<vmem>>, vector<12x80xf32>
    %cst = arith.constant dense<0.000000e+00> : vector<64x80xf32>
    %10 = tpu.matmul %8, %9, %cst {dimension_numbers = #tpu.dot_dimension_numbers<[1], [0], [0], [1], [0, 0, 1, 1], [], []>} : vector<64x12xf32>, vector<12x80xf32>, vector<64x80xf32> -> vector<64x80xf32>
    %c0_6 = arith.constant 0 : index
    %c0_7 = arith.constant 0 : index
    %11 = vector.load %arg5[%c0_6, %c0_7] : memref<1x80xf32, #tpu.memory_space<vmem>>, vector<1x80xf32>
    %12 = vector.broadcast %11 : vector<1x80xf32> to vector<64x80xf32>
    %13 = arith.addf %10, %12 : vector<64x80xf32>
    %14 = arith.negf %13 : vector<64x80xf32>
    %15 = math.exp %14 : vector<64x80xf32>
    %cst_8 = arith.constant 1.000000e+00 : f32
    %16 = vector.broadcast %cst_8 : f32 to vector<64x80xf32>
    %17 = arith.addf %16, %15 : vector<64x80xf32>
    %18 = arith.divf %16, %17 : vector<64x80xf32>
    %c0_9 = arith.constant 0 : index
    %c0_10 = arith.constant 0 : index
    %19 = vector.load %arg6[%c0_9, %c0_10] : memref<80x40xf32, #tpu.memory_space<vmem>>, vector<80x40xf32>
    %cst_11 = arith.constant dense<0.000000e+00> : vector<64x40xf32>
    %20 = tpu.matmul %18, %19, %cst_11 {dimension_numbers = #tpu.dot_dimension_numbers<[1], [0], [0], [1], [0, 0, 1, 1], [], []>} : vector<64x80xf32>, vector<80x40xf32>, vector<64x40xf32> -> vector<64x40xf32>
    %c0_12 = arith.constant 0 : index
    %c0_13 = arith.constant 0 : index
    %21 = vector.load %arg7[%c0_12, %c0_13] : memref<1x40xf32, #tpu.memory_space<vmem>>, vector<1x40xf32>
    %22 = vector.broadcast %21 : vector<1x40xf32> to vector<64x40xf32>
    %23 = arith.addf %20, %22 : vector<64x40xf32>
    %24 = arith.negf %23 : vector<64x40xf32>
    %25 = math.exp %24 : vector<64x40xf32>
    %cst_14 = arith.constant 1.000000e+00 : f32
    %26 = vector.broadcast %cst_14 : f32 to vector<64x40xf32>
    %27 = arith.addf %26, %25 : vector<64x40xf32>
    %28 = arith.divf %26, %27 : vector<64x40xf32>
    %29 = vector.shape_cast %28 : vector<64x40xf32> to vector<8x8x40xf32>
    %c0_15 = arith.constant 0 : index
    %c0_16 = arith.constant 0 : index
    %c0_17 = arith.constant 0 : index
    %30 = vector.load %arg8[%c0_15, %c0_16, %c0_17] : memref<1x1x40xf32, #tpu.memory_space<vmem>>, vector<1x1x40xf32>
    %31 = vector.broadcast %30 : vector<1x1x40xf32> to vector<8x8x40xf32>
    %32 = arith.mulf %29, %31 : vector<8x8x40xf32>
    %cst_18 = arith.constant dense<0.000000e+00> : vector<8x8xf32>
    %33 = vector.multi_reduction <add>, %32, %cst_18 [2] : vector<8x8x40xf32> to vector<8x8xf32>
    %34 = vector.shape_cast %33 : vector<8x8xf32> to vector<8x8x1xf32>
    %c0_19 = arith.constant 0 : index
    %c0_20 = arith.constant 0 : index
    %c0_21 = arith.constant 0 : index
    %35 = vector.load %arg9[%c0_19, %c0_20, %c0_21] : memref<1x1x1xf32, #tpu.memory_space<vmem>>, vector<1x1x1xf32>
    %36 = vector.broadcast %35 : vector<1x1x1xf32> to vector<8x8x1xf32>
    %37 = arith.addf %34, %36 : vector<8x8x1xf32>
    %38 = tpu.iota {dimensions = array<i32: 1>} : vector<8x8x1xi32>
    %c0_22 = arith.constant 0 : index
    %c0_23 = arith.constant 0 : index
    %39 = vector.load %arg3[%c0_22, %c0_23] : memref<8x1xi32, #tpu.memory_space<vmem>>, vector<8x1xi32>
    %40 = vector.shape_cast %39 : vector<8x1xi32> to vector<8x1x1xi32>
    %41 = vector.broadcast %40 : vector<8x1x1xi32> to vector<8x8x1xi32>
    %42 = arith.cmpi slt, %38, %41 : vector<8x8x1xi32>
    %cst_24 = arith.constant 0.000000e+00 : f32
    %43 = vector.broadcast %cst_24 : f32 to vector<8x8x1xf32>
    %44 = arith.select %42, %37, %43 : vector<8x8x1xi1>, vector<8x8x1xf32>
    %45 = vector.broadcast %44 : vector<8x8x1xf32> to vector<8x8x4xf32>
    %46 = arith.mulf %45, %1 : vector<8x8x4xf32>
    %cst_25 = arith.constant dense<0.000000e+00> : vector<8x4xf32>
    %47 = vector.multi_reduction <add>, %46, %cst_25 [1] : vector<8x8x4xf32> to vector<8x4xf32>
    %c0_26 = arith.constant 0 : index
    %c0_27 = arith.constant 0 : index
    %48 = vector.load %arg10[%c0_26, %c0_27] : memref<8x4xf32, #tpu.memory_space<vmem>>, vector<8x4xf32>
    tpu.vector_store %arg10[%c0_26, %c0_27], %47 {strides = array<i32>} : memref<8x4xf32, #tpu.memory_space<vmem>>, vector<8x4xf32>,
    return
  }
  func.func @transform_0(%arg0: i32) -> (i32, i32) {
    %c0_i32 = arith.constant 0 : i32
    %c0_i32_0 = arith.constant 0 : i32
    return %arg0, %c0_i32 : i32, i32
  }
  func.func @transform_1(%arg0: i32) -> (i32, i32, i32) {
    %c0_i32 = arith.constant 0 : i32
    %c0_i32_0 = arith.constant 0 : i32
    %c0_i32_1 = arith.constant 0 : i32
    return %arg0, %c0_i32, %c0_i32_0 : i32, i32, i32
  }
  func.func @transform_2(%arg0: i32) -> (i32, i32) {
    %c0_i32 = arith.constant 0 : i32
    %c0_i32_0 = arith.constant 0 : i32
    return %arg0, %c0_i32 : i32, i32
  }
  func.func @transform_3(%arg0: i32) -> (i32, i32) {
    %c0_i32 = arith.constant 0 : i32
    %c0_i32_0 = arith.constant 0 : i32
    %c0_i32_1 = arith.constant 0 : i32
    return %c0_i32, %c0_i32_0 : i32, i32
  }
  func.func @transform_4(%arg0: i32) -> (i32, i32) {
    %c0_i32 = arith.constant 0 : i32
    %c0_i32_0 = arith.constant 0 : i32
    %c0_i32_1 = arith.constant 0 : i32
    return %c0_i32, %c0_i32_0 : i32, i32
  }
  func.func @transform_5(%arg0: i32) -> (i32, i32) {
    %c0_i32 = arith.constant 0 : i32
    %c0_i32_0 = arith.constant 0 : i32
    %c0_i32_1 = arith.constant 0 : i32
    return %c0_i32, %c0_i32_0 : i32, i32
  }
  func.func @transform_6(%arg0: i32) -> (i32, i32) {
    %c0_i32 = arith.constant 0 : i32
    %c0_i32_0 = arith.constant 0 : i32
    %c0_i32_1 = arith.constant 0 : i32
    return %c0_i32, %c0_i32_0 : i32, i32
  }
  func.func @transform_7(%arg0: i32) -> (i32, i32, i32) {
    %c0_i32 = arith.constant 0 : i32
    %c0_i32_0 = arith.constant 0 : i32
    %c0_i32_1 = arith.constant 0 : i32
    %c0_i32_2 = arith.constant 0 : i32
    return %c0_i32, %c0_i32_0, %c0_i32_1 : i32, i32, i32
  }
  func.func @transform_8(%arg0: i32) -> (i32, i32, i32) {
    %c0_i32 = arith.constant 0 : i32
    %c0_i32_0 = arith.constant 0 : i32
    %c0_i32_1 = arith.constant 0 : i32
    %c0_i32_2 = arith.constant 0 : i32
    return %c0_i32, %c0_i32_0, %c0_i32_1 : i32, i32, i32
  }
  func.func @transform_9(%arg0: i32) -> (i32, i32) {
    %c0_i32 = arith.constant 0 : i32
    %c0_i32_0 = arith.constant 0 : i32
    return %arg0, %c0_i32 : i32, i32
  }
}

</mosaic_0001>

<llo_original>
// kernel: tpu_custom_call.1
$region0: #{tpu_custom_call.1}
  #allocation0 [shape = 'u32[]', space=smem, size = 0x4, offset = 0x4, fixed_abs, tag = 'smem constant byte address 0x4 - core index']
  #allocation1 [shape = 'u32[144,128]{1,0:T(1,128)}', space=vmem, size = 0x12000, scoped, tag = 'internal scratch']
  #allocation2 [shape = 'f32[1,1,1]{2,1,0:T(1,128)S(1)}', space=vmem, size = 0x200, scoped, tag = 'scoped memory for tpu_custom_call.1']
  %s0 = inlined_call_operand.vmem [shape: f32[16,4], index: 0, kind: input, shape index: {}]
  %s1 = inlined_call_operand.vmem [shape: f32[16,8,4], index: 1, kind: input, shape index: {}]
  %s2 = inlined_call_operand.vmem [shape: s32[16,1], index: 2, kind: input, shape index: {}]
  %s3 = inlined_call_operand.vmem [shape: f32[12,80], index: 3, kind: input, shape index: {}]
  %s4 = inlined_call_operand.vmem [shape: f32[1,80], index: 4, kind: input, shape index: {}]
  %s5 = inlined_call_operand.vmem [shape: f32[80,40], index: 5, kind: input, shape index: {}]
  %s6 = inlined_call_operand.vmem [shape: f32[1,40], index: 6, kind: input, shape index: {}]
  %s7 = inlined_call_operand.vmem [shape: f32[1,1,40], index: 7, kind: input, shape index: {}]
  %s8 = inlined_call_operand.<no memory space> [shape: f32[1,1,1], index: 8, kind: input, shape index: {}]
  %s9 = inlined_call_operand.vmem [shape: f32[16,4], index: 9, kind: output, shape index: {}]
  %s10 = sld [smem:[#allocation0]]
  $region69: #{tpu_custom_call.1} parent=0
    _
  %s12 = ssub.s32 1, %s10
  %s13 = scalar_select 0, %s12, %s10
  %v14 = vstv %s8
  %15 = vst [vmem:[#allocation2] sm:$0x1] %v14
  loop: start=0, step=1, limit=4
  $region2: #{tpu_custom_call.1} parent=0 // loop_pre_header
    _
  $region3: #{tpu_custom_call.1} parent=0 // loop_header
    %s17 = sphi 0, %s21
    %p18 = scmp.ge.s32.totalorder %s17, 4
    %s27 = sphi 0, %s29
    %s30 = sphi 0, %s27
    %s31 = sphi 0, %s30
    %s47 = sphi 0, %s31
    %s53 = sphi 0, %s55
    %s56 = sphi 0, %s53
    %s57 = sphi 0, %s56
    %s73 = sphi 0, %s57
    %s79 = sphi 0, %s81
    %s82 = sphi 0, %s79
    %s83 = sphi 0, %s82
    %s99 = sphi 0, %s83
    %s103 = sphi 0, %s103
    %s105 = sphi 0, %s103
    %s106 = sphi 0, %s105
    %s120 = sphi 0, %s106
    %s124 = sphi 0, %s124
    %s126 = sphi 0, %s124
    %s127 = sphi 0, %s126
    %s141 = sphi 0, %s127
    %s145 = sphi 0, %s145
    %s147 = sphi 0, %s145
    %s148 = sphi 0, %s147
    %s162 = sphi 0, %s148
    %s166 = sphi 0, %s166
    %s168 = sphi 0, %s166
    %s169 = sphi 0, %s168
    %s183 = sphi 0, %s169
    %s187 = sphi 0, %s187
    %s189 = sphi 0, %s187
    %s190 = sphi 0, %s189
    %s204 = sphi 0, %s190
    %s208 = sphi 0, %s208
    %s210 = sphi 0, %s208
    %s211 = sphi 0, %s210
    %s225 = sphi 0, %s211
    %s231 = sphi 0, %s233
    %s234 = sphi 0, %s231
    %s235 = sphi 0, %s234
    %s251 = sphi 0, %s235
  $region4: #{tpu_custom_call.1} parent=0 // loop_header_branch
    %20 = sbr.rel (%p18) target = $region8
  $region5: #{tpu_custom_call.1} parent=0 // loop_body
    %s22 = ssub.s32 %s17, 1
    %s23 = ssub.s32 %s17, 2
    %s24 = sadd.s32 %s17, 1
    %s25 = ssub.s32 %s17, %s24
    %p26 = scmp.eq.s32.totalorder %s25, 0
    %s28 = sadd.s32 %s27, 1
    %s29 = scalar_select %p26, %s27, %s28
    %p32 = pneg %p26
    %p33 = scmp.eq.s32.totalorder %s17, 1
    %p34 = por %p32, %p33
    %p35 = scmp.ne.s32.totalorder %s27, %s30
    %p36 = scmp.eq.s32.totalorder %s17, 0
    %p37 = por %p35, %p36
    %p38 = scmp.ne.s32.totalorder %s27, %s30
    %p39 = scmp.eq.s32.totalorder %s22, 1
    %p40 = por %p38, %p39
    %p41 = scmp.ne.s32.totalorder %s30, %s31
    %p42 = scmp.eq.s32.totalorder %s22, 0
    %p43 = por %p41, %p42
    %p44 = scmp.ne.s32.totalorder %s30, %s31
    %p45 = scmp.eq.s32.totalorder %s23, 1
    %p46 = por %p44, %p45
    %p48 = scmp.ne.s32.totalorder %s31, %s47
    %p49 = scmp.eq.s32.totalorder %s23, 0
    %p50 = por %p48, %p49
    %s51 = ssub.s32 %s17, %s24
    %p52 = scmp.eq.s32.totalorder %s51, 0
    %s54 = sadd.s32 %s53, 1
    %s55 = scalar_select %p52, %s53, %s54
    %p58 = pneg %p52
    %p59 = scmp.eq.s32.totalorder %s17, 1
    %p60 = por %p58, %p59
    %p61 = scmp.ne.s32.totalorder %s53, %s56
    %p62 = scmp.eq.s32.totalorder %s17, 0
    %p63 = por %p61, %p62
    %p64 = scmp.ne.s32.totalorder %s53, %s56
    %p65 = scmp.eq.s32.totalorder %s22, 1
    %p66 = por %p64, %p65
    %p67 = scmp.ne.s32.totalorder %s56, %s57
    %p68 = scmp.eq.s32.totalorder %s22, 0
    %p69 = por %p67, %p68
    %p70 = scmp.ne.s32.totalorder %s56, %s57
    %p71 = scmp.eq.s32.totalorder %s23, 1
    %p72 = por %p70, %p71
    %p74 = scmp.ne.s32.totalorder %s57, %s73
    %p75 = scmp.eq.s32.totalorder %s23, 0
    %p76 = por %p74, %p75
    %s77 = ssub.s32 %s17, %s24
    %p78 = scmp.eq.s32.totalorder %s77, 0
    %s80 = sadd.s32 %s79, 1
    %s81 = scalar_select %p78, %s79, %s80
    %p84 = pneg %p78
    %p85 = scmp.eq.s32.totalorder %s17, 1
    %p86 = por %p84, %p85
    %p87 = scmp.ne.s32.totalorder %s79, %s82
    %p88 = scmp.eq.s32.totalorder %s17, 0
    %p89 = por %p87, %p88
    %p90 = scmp.ne.s32.totalorder %s79, %s82
    %p91 = scmp.eq.s32.totalorder %s22, 1
    %p92 = por %p90, %p91
    %p93 = scmp.ne.s32.totalorder %s82, %s83
    %p94 = scmp.eq.s32.totalorder %s22, 0
    %p95 = por %p93, %p94
    %p96 = scmp.ne.s32.totalorder %s82, %s83
    %p97 = scmp.eq.s32.totalorder %s23, 1
    %p98 = por %p96, %p97
    %p100 = scmp.ne.s32.totalorder %s83, %s99
    %p101 = scmp.eq.s32.totalorder %s23, 0
    %p102 = por %p100, %p101
    %s104 = sadd.s32 %s103, 1
    %p107 = scmp.eq.s32.totalorder %s17, 1
    %p108 = scmp.ne.s32.totalorder %s103, %s105
    %p109 = scmp.eq.s32.totalorder %s17, 0
    %p110 = por %p108, %p109
    %p111 = scmp.ne.s32.totalorder %s103, %s105
    %p112 = scmp.eq.s32.totalorder %s22, 1
    %p113 = por %p111, %p112
    %p114 = scmp.ne.s32.totalorder %s105, %s106
    %p115 = scmp.eq.s32.totalorder %s22, 0
    %p116 = por %p114, %p115
    %p117 = scmp.ne.s32.totalorder %s105, %s106
    %p118 = scmp.eq.s32.totalorder %s23, 1
    %p119 = por %p117, %p118
    %p121 = scmp.ne.s32.totalorder %s106, %s120
    %p122 = scmp.eq.s32.totalorder %s23, 0
    %p123 = por %p121, %p122
    %s125 = sadd.s32 %s124, 1
    %p128 = scmp.eq.s32.totalorder %s17, 1
    %p129 = scmp.ne.s32.totalorder %s124, %s126
    %p130 = scmp.eq.s32.totalorder %s17, 0
    %p131 = por %p129, %p130
    %p132 = scmp.ne.s32.totalorder %s124, %s126
    %p133 = scmp.eq.s32.totalorder %s22, 1
    %p134 = por %p132, %p133
    %p135 = scmp.ne.s32.totalorder %s126, %s127
    %p136 = scmp.eq.s32.totalorder %s22, 0
    %p137 = por %p135, %p136
    %p138 = scmp.ne.s32.totalorder %s126, %s127
    %p139 = scmp.eq.s32.totalorder %s23, 1
    %p140 = por %p138, %p139
    %p142 = scmp.ne.s32.totalorder %s127, %s141
    %p143 = scmp.eq.s32.totalorder %s23, 0
    %p144 = por %p142, %p143
    %s146 = sadd.s32 %s145, 1
    %p149 = scmp.eq.s32.totalorder %s17, 1
    %p150 = scmp.ne.s32.totalorder %s145, %s147
    %p151 = scmp.eq.s32.totalorder %s17, 0
    %p152 = por %p150, %p151
    %p153 = scmp.ne.s32.totalorder %s145, %s147
    %p154 = scmp.eq.s32.totalorder %s22, 1
    %p155 = por %p153, %p154
    %p156 = scmp.ne.s32.totalorder %s147, %s148
    %p157 = scmp.eq.s32.totalorder %s22, 0
    %p158 = por %p156, %p157
    %p159 = scmp.ne.s32.totalorder %s147, %s148
    %p160 = scmp.eq.s32.totalorder %s23, 1
    %p161 = por %p159, %p160
    %p163 = scmp.ne.s32.totalorder %s148, %s162
    %p164 = scmp.eq.s32.totalorder %s23, 0
    %p165 = por %p163, %p164
    %s167 = sadd.s32 %s166, 1
    %p170 = scmp.eq.s32.totalorder %s17, 1
    %p171 = scmp.ne.s32.totalorder %s166, %s168
    %p172 = scmp.eq.s32.totalorder %s17, 0
    %p173 = por %p171, %p172
    %p174 = scmp.ne.s32.totalorder %s166, %s168
    %p175 = scmp.eq.s32.totalorder %s22, 1
    %p176 = por %p174, %p175
    %p177 = scmp.ne.s32.totalorder %s168, %s169
    %p178 = scmp.eq.s32.totalorder %s22, 0
    %p179 = por %p177, %p178
    %p180 = scmp.ne.s32.totalorder %s168, %s169
    %p181 = scmp.eq.s32.totalorder %s23, 1
    %p182 = por %p180, %p181
    %p184 = scmp.ne.s32.totalorder %s169, %s183
    %p185 = scmp.eq.s32.totalorder %s23, 0
    %p186 = por %p184, %p185
    %s188 = sadd.s32 %s187, 1
    %p191 = scmp.eq.s32.totalorder %s17, 1
    %p192 = scmp.ne.s32.totalorder %s187, %s189
    %p193 = scmp.eq.s32.totalorder %s17, 0
    %p194 = por %p192, %p193
    %p195 = scmp.ne.s32.totalorder %s187, %s189
    %p196 = scmp.eq.s32.totalorder %s22, 1
    %p197 = por %p195, %p196
    %p198 = scmp.ne.s32.totalorder %s189, %s190
    %p199 = scmp.eq.s32.totalorder %s22, 0
    %p200 = por %p198, %p199
    %p201 = scmp.ne.s32.totalorder %s189, %s190
    %p202 = scmp.eq.s32.totalorder %s23, 1
    %p203 = por %p201, %p202
    %p205 = scmp.ne.s32.totalorder %s190, %s204
    %p206 = scmp.eq.s32.totalorder %s23, 0
    %p207 = por %p205, %p206
    %s209 = sadd.s32 %s208, 1
    %p212 = scmp.eq.s32.totalorder %s17, 1
    %p213 = scmp.ne.s32.totalorder %s208, %s210
    %p214 = scmp.eq.s32.totalorder %s17, 0
    %p215 = por %p213, %p214
    %p216 = scmp.ne.s32.totalorder %s208, %s210
    %p217 = scmp.eq.s32.totalorder %s22, 1
    %p218 = por %p216, %p217
    %p219 = scmp.ne.s32.totalorder %s210, %s211
    %p220 = scmp.eq.s32.totalorder %s22, 0
    %p221 = por %p219, %p220
    %p222 = scmp.ne.s32.totalorder %s210, %s211
    %p223 = scmp.eq.s32.totalorder %s23, 1
    %p224 = por %p222, %p223
    %p226 = scmp.ne.s32.totalorder %s211, %s225
    %p227 = scmp.eq.s32.totalorder %s23, 0
    %p228 = por %p226, %p227
    %s229 = ssub.s32 %s17, %s24
    %p230 = scmp.eq.s32.totalorder %s229, 0
    %s232 = sadd.s32 %s231, 1
    %s233 = scalar_select %p230, %s231, %s232
    %p236 = pneg %p230
    %p237 = scmp.eq.s32.totalorder %s17, 1
    %p238 = por %p236, %p237
    %p239 = scmp.ne.s32.totalorder %s231, %s234
    %p240 = scmp.eq.s32.totalorder %s17, 0
    %p241 = por %p239, %p240
    %p242 = scmp.ne.s32.totalorder %s231, %s234
    %p243 = scmp.eq.s32.totalorder %s22, 1
    %p244 = por %p242, %p243
    %p245 = scmp.ne.s32.totalorder %s234, %s235
    %p246 = scmp.eq.s32.totalorder %s22, 0
    %p247 = por %p245, %p246
    %p248 = scmp.ne.s32.totalorder %s234, %s235
    %p249 = scmp.eq.s32.totalorder %s23, 1
    %p250 = por %p248, %p249
    %p252 = scmp.ne.s32.totalorder %s235, %s251
    %p253 = scmp.eq.s32.totalorder %s23, 0
    %p254 = por %p252, %p253
    %p255 = scmp.le.s32.totalorder 1, %s17
    %p256 = scmp.lt.s32.totalorder %s17, 3
    %p257 = pnand %p255, %p256
    %p258 = pneg %p257
    // Predicated region
    $region9: #{tpu_custom_call.1} parent=5 // pred_check
      _
    $region10: #{tpu_custom_call.1} parent=5 // pred_check_branch
      %260 = sbr.rel (%p257) target = $region12
    $region11: #{tpu_custom_call.1} parent=5 // pred_region
      %s261 = ssub.s32 %s17, 1
      // Predicated region
      $region13: #{tpu_custom_call.1} parent=11 // pred_check
        %p262 = pneg %p116
      $region14: #{tpu_custom_call.1} parent=11 // pred_check_branch
        %264 = sbr.rel (%p262) target = $region16
      $region15: #{tpu_custom_call.1} parent=11 // pred_region
        _
      $region16: #{tpu_custom_call.1} parent=11 // pred_fallthru
        _
      // Predicated region
      $region17: #{tpu_custom_call.1} parent=11 // pred_check
        %p265 = pneg %p137
      $region18: #{tpu_custom_call.1} parent=11 // pred_check_branch
        %267 = sbr.rel (%p265) target = $region20
      $region19: #{tpu_custom_call.1} parent=11 // pred_region
        _
      $region20: #{tpu_custom_call.1} parent=11 // pred_fallthru
        _
      // Predicated region
      $region21: #{tpu_custom_call.1} parent=11 // pred_check
        %p268 = pneg %p158
      $region22: #{tpu_custom_call.1} parent=11 // pred_check_branch
        %270 = sbr.rel (%p268) target = $region24
      $region23: #{tpu_custom_call.1} parent=11 // pred_region
        _
      $region24: #{tpu_custom_call.1} parent=11 // pred_fallthru
        _
      // Predicated region
      $region25: #{tpu_custom_call.1} parent=11 // pred_check
        %p271 = pneg %p179
      $region26: #{tpu_custom_call.1} parent=11 // pred_check_branch
        %273 = sbr.rel (%p271) target = $region28
      $region27: #{tpu_custom_call.1} parent=11 // pred_region
        _
      $region28: #{tpu_custom_call.1} parent=11 // pred_fallthru
        _
      // Predicated region
      $region29: #{tpu_custom_call.1} parent=11 // pred_check
        %p274 = pneg %p200
      $region30: #{tpu_custom_call.1} parent=11 // pred_check_branch
        %276 = sbr.rel (%p274) target = $region32
      $region31: #{tpu_custom_call.1} parent=11 // pred_region
        _
      $region32: #{tpu_custom_call.1} parent=11 // pred_fallthru
        _
      // Predicated region
      $region33: #{tpu_custom_call.1} parent=11 // pred_check
        %p277 = pneg %p221
      $region34: #{tpu_custom_call.1} parent=11 // pred_check_branch
        %279 = sbr.rel (%p277) target = $region36
      $region35: #{tpu_custom_call.1} parent=11 // pred_region
        _
      $region36: #{tpu_custom_call.1} parent=11 // pred_fallthru
        _
    $region12: #{tpu_custom_call.1} parent=5 // pred_fallthru
      _
    %p280 = scmp.lt.s32.totalorder %s17, 2
    // Predicated region
    $region37: #{tpu_custom_call.1} parent=5 // pred_check
      %p281 = pneg %p280
    $region38: #{tpu_custom_call.1} parent=5 // pred_check_branch
      %283 = sbr.rel (%p281) target = $region40
    $region39: #{tpu_custom_call.1} parent=5 // pred_region
      // Predicated region
      $region41: #{tpu_custom_call.1} parent=39 // pred_check
        %p284 = pneg %p37
      $region42: #{tpu_custom_call.1} parent=39 // pred_check_branch
        %286 = sbr.rel (%p284) target = $region44
      $region43: #{tpu_custom_call.1} parent=39 // pred_region
        %p287 = scmp.lt.s32.totalorder %s17, 1
        %s288 = scalar_select %p287, %s17, 1
        %s289 = smul.addr %s288, 8
        %s290 = scalar_lea.vmem %s0, %s289
      $region44: #{tpu_custom_call.1} parent=39 // pred_fallthru
        _
      // Predicated region
      $region45: #{tpu_custom_call.1} parent=39 // pred_check
        %p291 = pneg %p63
      $region46: #{tpu_custom_call.1} parent=39 // pred_check_branch
        %293 = sbr.rel (%p291) target = $region48
      $region47: #{tpu_custom_call.1} parent=39 // pred_region
        %s294 = smul.u32 8, %s17
        %p295 = scmp.lt.s32.totalorder %s294, 15
        %s296 = scalar_select %p295, %s294, 15
        %s297 = smul.addr %s296, 8
        %s298 = scalar_lea.vmem %s1, %s297
        %s299 = smul.u32 8, %s17
      $region48: #{tpu_custom_call.1} parent=39 // pred_fallthru
        _
      // Predicated region
      $region49: #{tpu_custom_call.1} parent=39 // pred_check
        %p300 = pneg %p89
      $region50: #{tpu_custom_call.1} parent=39 // pred_check_branch
        %302 = sbr.rel (%p300) target = $region52
      $region51: #{tpu_custom_call.1} parent=39 // pred_region
        %p303 = scmp.lt.s32.totalorder %s17, 1
        %s304 = scalar_select %p303, %s17, 1
        %s305 = smul.addr %s304, 8
        %s306 = scalar_lea.vmem %s2, %s305
      $region52: #{tpu_custom_call.1} parent=39 // pred_fallthru
        _
    $region40: #{tpu_custom_call.1} parent=5 // pred_fallthru
      _
    %p307 = scmp.le.s32.totalorder 1, %s17
    %p308 = scmp.lt.s32.totalorder %s17, 3
    %p309 = pnand %p307, %p308
    %p310 = pneg %p309
    // Predicated region
    $region53: #{tpu_custom_call.1} parent=5 // pred_check
      _
    $region54: #{tpu_custom_call.1} parent=5 // pred_check_branch
      %312 = sbr.rel (%p309) target = $region56
    $region55: #{tpu_custom_call.1} parent=5 // pred_region
      %s313 = ssub.s32 %s17, 1
      %p314 = scmp.lt.s32.totalorder %s22, 1
      %s315 = scalar_select %p314, %s22, 1
      %s316 = smul.addr %s315, 8
      %s317 = scalar_lea.vmem %s0, %s316
      %p318 = pneg %p43
      %p319 = pneg %p40
      %s320 = smul.u32 8, %s22
      %p321 = scmp.lt.s32.totalorder %s320, 15
      %s322 = scalar_select %p321, %s320, 15
      %s323 = smul.addr %s322, 8
      %s324 = scalar_lea.vmem %s1, %s323
      %p325 = pneg %p69
      %p326 = pneg %p66
      %p327 = scmp.lt.s32.totalorder %s22, 1
      %s328 = scalar_select %p327, %s22, 1
      %s329 = smul.addr %s328, 8
      %s330 = scalar_lea.vmem %s2, %s329
      %p331 = pneg %p95
      %p332 = pneg %p92
      %p333 = pneg %p116
      %p334 = pneg %p113
      %p335 = pneg %p137
      %p336 = pneg %p134
      %p337 = pneg %p158
      %p338 = pneg %p155
      %p339 = pneg %p179
      %p340 = pneg %p176
      %p341 = pneg %p200
      %p342 = pneg %p197
      %p343 = pneg %p221
      %p344 = pneg %p218
      %p345 = pneg %p247
      %p346 = pneg %p244
      %p347 = scmp.lt.s32.totalorder %s22, 1
      %s348 = scalar_select %p347, %s22, 1
      %s349 = smul.addr %s348, 8
      %s350 = scalar_lea.vmem %s9, %s349
      %p351 = scmp.lt.s32.totalorder %s22, 1
      %s352 = scalar_select %p351, %s22, 1
      %s353 = smul.addr %s352, 8
      %s354 = scalar_lea.vmem %s0, %s353
      %s355 = smul.u32 8, %s22
      %p356 = scmp.lt.s32.totalorder %s355, 15
      %s357 = scalar_select %p356, %s355, 15
      %s358 = smul.addr %s357, 8
      %s359 = scalar_lea.vmem %s1, %s358
      %s360 = smul.u32 8, %s22
      %p361 = scmp.lt.s32.totalorder %s22, 1
      %s362 = scalar_select %p361, %s22, 1
      %s363 = smul.addr %s362, 8
      %s364 = scalar_lea.vmem %s2, %s363
      %p365 = scmp.lt.s32.totalorder %s22, 1
      %s366 = scalar_select %p365, %s22, 1
      %s367 = smul.addr %s366, 8
      %s368 = scalar_lea.vmem %s9, %s367
      %v369 = vld [vmem:[%s354] sm:$0xff]
      %v370 = vld [vmem:[%s359] sm:$0xff]
      %v371 = vld [vmem:[%s359 + $0x8] sm:$0xff]
      %v372 = vld [vmem:[%s359 + $0x10] sm:$0xff]
      %v373 = vld [vmem:[%s359 + $0x18] sm:$0xff]
      %v374 = vld [vmem:[%s359 + $0x20] sm:$0xff]
      %v375 = vld [vmem:[%s359 + $0x28] sm:$0xff]
      %v376 = vld [vmem:[%s359 + $0x30] sm:$0xff]
      %v377 = vld [vmem:[%s359 + $0x38] sm:$0xff]
      %v379 = vcombine.high %v369, %v369
      %v381 = vunpack.c.l.s4 1966171168
      %v382 = vunpack.c.0.s8 %v381
      %v383 = vlaneseq
      %v384 = vshrl.u32 %v383, 7
      %v385 = vsub.s32 %v382, %v384
      %v386 = vrot.slane %v369, %v385
      %v388 = vunpack.c.l.s4 1966171168
      %v389 = vunpack.c.0.s8 %v388
      %v390 = vlaneseq
      %v391 = vshrl.u32 %v390, 7
      %v392 = vsub.s32 %v389, %v391
      %v393 = vrot.slane %v379, %v392
      %v394 = vcombine.high %v386, %v386
      %v395 = vcombine.high %v393, %v393
      %v397 = vunpack.c.l.s4 1966171168
      %v398 = vunpack.c.0.s8 %v397
      %v399 = vlaneseq
      %v400 = vshrl.u32 %v399, 7
      %v401 = vsub.s32 %v398, %v400
      %v402 = vrot.slane %v386, %v401
      %v404 = vunpack.c.l.s4 1966171168
      %v405 = vunpack.c.0.s8 %v404
      %v406 = vlaneseq
      %v407 = vshrl.u32 %v406, 7
      %v408 = vsub.s32 %v405, %v407
      %v409 = vrot.slane %v393, %v408
      %v411 = vunpack.c.l.s4 1966171168
      %v412 = vunpack.c.0.s8 %v411
      %v413 = vlaneseq
      %v414 = vshrl.u32 %v413, 7
      %v415 = vsub.s32 %v412, %v414
      %v416 = vrot.slane %v394, %v415
      %v418 = vunpack.c.l.s4 1966171168
      %v419 = vunpack.c.0.s8 %v418
      %v420 = vlaneseq
      %v421 = vshrl.u32 %v420, 7
      %v422 = vsub.s32 %v419, %v421
      %v423 = vrot.slane %v395, %v422
      %v424 = vcombine.high %v402, %v402
      %v425 = vcombine.high %v409, %v409
      %v426 = vcombine.high %v416, %v416
      %v427 = vcombine.high %v423, %v423
      %v428 = vlaneseq
      %v429 = vshrl.u32 %v428, 7
      %v430 = vsub.s32 0, %v429
      %v431 = vrot.slane %v402, %v430
      %v432 = vlaneseq
      %v433 = vshrl.u32 %v432, 7
      %v434 = vsub.s32 0, %v433
      %v435 = vrot.slane %v416, %v434
      %v436 = vlaneseq
      %v437 = vshrl.u32 %v436, 7
      %v438 = vsub.s32 0, %v437
      %v439 = vrot.slane %v424, %v438
      %v440 = vlaneseq
      %v441 = vshrl.u32 %v440, 7
      %v442 = vsub.s32 0, %v441
      %v443 = vrot.slane %v426, %v442
      %v444 = vlaneseq
      %v445 = vshrl.u32 %v444, 7
      %v446 = vsub.s32 0, %v445
      %v447 = vrot.slane %v409, %v446
      %v448 = vlaneseq
      %v449 = vshrl.u32 %v448, 7
      %v450 = vsub.s32 0, %v449
      %v451 = vrot.slane %v423, %v450
      %v452 = vlaneseq
      %v453 = vshrl.u32 %v452, 7
      %v454 = vsub.s32 0, %v453
      %v455 = vrot.slane %v425, %v454
      %v456 = vlaneseq
      %v457 = vshrl.u32 %v456, 7
      %v458 = vsub.s32 0, %v457
      %v459 = vrot.slane %v427, %v458
      %v468 = vmul.f32 %v431, %v370
      %v469 = vmul.f32 %v435, %v371
      %v470 = vmul.f32 %v439, %v372
      %v471 = vmul.f32 %v443, %v373
      %v472 = vmul.f32 %v447, %v374
      %v473 = vmul.f32 %v451, %v375
      %v474 = vmul.f32 %v455, %v376
      %v475 = vmul.f32 %v459, %v377
      %484 = vrot.lane.b32.xlu0 %v370, 4
      %v485 = vpop.permute.xlu0 %484
      %486 = vrot.lane.b32.xlu0 %v371, 4
      %v487 = vpop.permute.xlu0 %486
      %488 = vrot.lane.b32.xlu0 %v372, 4
      %v489 = vpop.permute.xlu0 %488
      %490 = vrot.lane.b32.xlu0 %v373, 4
      %v491 = vpop.permute.xlu0 %490
      %492 = vrot.lane.b32.xlu0 %v374, 4
      %v493 = vpop.permute.xlu0 %492
      %494 = vrot.lane.b32.xlu0 %v375, 4
      %v495 = vpop.permute.xlu0 %494
      %496 = vrot.lane.b32.xlu0 %v376, 4
      %v497 = vpop.permute.xlu0 %496
      %498 = vrot.lane.b32.xlu0 %v377, 4
      %v499 = vpop.permute.xlu0 %498
      %516 = vrot.lane.b32.xlu0 %v468, 8
      %v517 = vpop.permute.xlu0 %516
      %518 = vrot.lane.b32.xlu0 %v469, 8
      %v519 = vpop.permute.xlu0 %518
      %520 = vrot.lane.b32.xlu0 %v470, 8
      %v521 = vpop.permute.xlu0 %520
      %522 = vrot.lane.b32.xlu0 %v471, 8
      %v523 = vpop.permute.xlu0 %522
      %524 = vrot.lane.b32.xlu0 %v472, 8
      %v525 = vpop.permute.xlu0 %524
      %526 = vrot.lane.b32.xlu0 %v473, 8
      %v527 = vpop.permute.xlu0 %526
      %528 = vrot.lane.b32.xlu0 %v474, 8
      %v529 = vpop.permute.xlu0 %528
      %530 = vrot.lane.b32.xlu0 %v475, 8
      %v531 = vpop.permute.xlu0 %530
      %vm540 = vcmask 31744
      %v541 = vsel %vm540, %v431, %v485
      %v542 = vsel %vm540, %v435, %v487
      %v543 = vsel %vm540, %v439, %v489
      %v544 = vsel %vm540, %v443, %v491
      %v545 = vsel %vm540, %v447, %v493
      %v546 = vsel %vm540, %v451, %v495
      %v547 = vsel %vm540, %v455, %v497
      %v548 = vsel %vm540, %v459, %v499
      %vm549 = vcmask 64512
      %v550 = vsel %vm549, %v541, %v517
      %v551 = vsel %vm549, %v542, %v519
      %v552 = vsel %vm549, %v543, %v521
      %v553 = vsel %vm549, %v544, %v523
      %v554 = vsel %vm549, %v545, %v525
      %v555 = vsel %vm549, %v546, %v527
      %v556 = vsel %vm549, %v547, %v529
      %v557 = vsel %vm549, %v548, %v531
      %v558 = vld [vmem:[%s3] sm:$0xff]
      %v559 = vld [vmem:[%s3 + $0x8] sm:$0xf]
      %v560 = vld [vmem:[%s4] sm:$0x1]
      %v562 = vlaneseq
      %v563 = vshrl.u32 %v562, 7
      %v564 = vsub.s32 0, %v563
      %v565 = vrot.slane %v560, %v564
      %vm567 = vcmask 97280
      %v569 = vsel %vm567, %v550, 0
      %v572 = vsel %vm567, %v551, 0
      %v575 = vsel %vm567, %v552, 0
      %v578 = vsel %vm567, %v553, 0
      %v581 = vsel %vm567, %v554, 0
      %v584 = vsel %vm567, %v555, 0
      %v587 = vsel %vm567, %v556, 0
      %v590 = vsel %vm567, %v557, 0
      %vm592 = vcmask 1043456
      %v594 = vsel %vm592, %v559, 0
      %596 = vmatprep.subr.mxu0 0.0
      %597 = vmatpush1.msra.mxu0 %v558
      %598 = vmatprep.subr.mxu0 0.0
      %599 = vmatpush1.msra.mxu0 %v594
      %600 = vmatprep.subr.mxu0 0.0
      %601 = vmatpush1.msra.mxu0 0.0
      %602 = vmatprep.subr.mxu0 0.0
      %603 = vmatpush1.msra.mxu0 0.0
      %604 = vmatprep.subr.mxu0 0.0
      %605 = vmatpush1.msra.mxu0 0.0
      %606 = vmatprep.subr.mxu0 0.0
      %607 = vmatpush1.msra.mxu0 0.0
      %608 = vmatprep.subr.mxu0 0.0
      %609 = vmatpush1.msra.mxu0 0.0
      %610 = vmatprep.subr.mxu0 0.0
      %611 = vmatpush1.msra.mxu0 0.0
      %612 = vmatprep.subr.mxu0 0.0
      %613 = vmatpush1.msra.mxu0 0.0
      %614 = vmatprep.subr.mxu0 0.0
      %615 = vmatpush1.msra.mxu0 0.0
      %616 = vmatprep.subr.mxu0 0.0
      %617 = vmatpush1.msra.mxu0 0.0
      %618 = vmatprep.subr.mxu0 0.0
      %619 = vmatpush1.msra.mxu0 0.0
      %620 = vmatprep.subr.mxu0 0.0
      %621 = vmatpush1.msra.mxu0 0.0
      %622 = vmatprep.subr.mxu0 0.0
      %623 = vmatpush1.msra.mxu0 0.0
      %624 = vmatprep.subr.mxu0 0.0
      %625 = vmatpush1.msra.mxu0 0.0
      %626 = vmatprep.subr.mxu0 0.0
      %627 = vmatpush1.msra.mxu0 0.0
      %628 = vmatprep.subr.mxu0 0.0
      %629 = vmatpush1.msra.mxu0 0.0
      %630 = vmatprep.subr.mxu0 0.0
      %631 = vmatpush1.msra.mxu0 0.0
      %632 = vmatprep.subr.mxu0 0.0
      %633 = vmatpush1.msra.mxu0 0.0
      %634 = vmatprep.subr.mxu0 0.0
      %635 = vmatpush1.msra.mxu0 0.0
      %636 = vmatprep.subr.mxu0 0.0
      %637 = vmatpush1.msra.mxu0 0.0
      %638 = vmatprep.subr.mxu0 0.0
      %639 = vmatpush1.msra.mxu0 0.0
      %640 = vmatprep.subr.mxu0 0.0
      %641 = vmatpush1.msra.mxu0 0.0
      %642 = vmatprep.subr.mxu0 0.0
      %643 = vmatpush1.msra.mxu0 0.0
      %644 = vmatprep.subr.mxu0 0.0
      %645 = vmatpush1.msra.mxu0 0.0
      %646 = vmatprep.subr.mxu0 0.0
      %647 = vmatpush1.msra.mxu0 0.0
      %648 = vmatprep.subr.mxu0 0.0
      %649 = vmatpush1.msra.mxu0 0.0
      %650 = vmatprep.subr.mxu0 0.0
      %651 = vmatpush1.msra.mxu0 0.0
      %652 = vmatprep.subr.mxu0 0.0
      %653 = vmatpush1.msra.mxu0 0.0
      %654 = vmatprep.subr.mxu0 0.0
      %655 = vmatpush1.msra.mxu0 0.0
      %656 = vmatprep.subr.mxu0 0.0
      %657 = vmatpush1.msra.mxu0 0.0
      %658 = vmatprep.subr.mxu0 0.0
      %659 = vmatpush1.msra.mxu0 0.0
      %660 = vmatprep.mubr.f32.mxu0 0.0
      %661 = vmatmul.mubr.f32.gmra.mrb[0].mxu0 %v569
      %v662 = vpop.f32.mrb[0].mxu0
      %v663 = vadd.f32 %v565, %v662
      %v664 = vpop.f32.mrb[0].mxu0
      %665 = vmatprep.mubr.f32.mxu0 0.0
      %666 = vmatmul.mubr.f32.gmra.mrb[0].mxu0 %v572
      %v667 = vpop.f32.mrb[0].mxu0
      %v668 = vadd.f32 %v565, %v667
      %v669 = vpop.f32.mrb[0].mxu0
      %670 = vmatprep.mubr.f32.mxu0 0.0
      %671 = vmatmul.mubr.f32.gmra.mrb[0].mxu0 %v575
      %v672 = vpop.f32.mrb[0].mxu0
      %v673 = vadd.f32 %v565, %v672
      %v674 = vpop.f32.mrb[0].mxu0
      %675 = vmatprep.mubr.f32.mxu0 0.0
      %676 = vmatmul.mubr.f32.gmra.mrb[0].mxu0 %v578
      %v677 = vpop.f32.mrb[0].mxu0
      %v678 = vadd.f32 %v565, %v677
      %v679 = vpop.f32.mrb[0].mxu0
      %680 = vmatprep.mubr.f32.mxu0 0.0
      %681 = vmatmul.mubr.f32.gmra.mrb[0].mxu0 %v581
      %v682 = vpop.f32.mrb[0].mxu0
      %v683 = vadd.f32 %v565, %v682
      %v684 = vpop.f32.mrb[0].mxu0
      %685 = vmatprep.mubr.f32.mxu0 0.0
      %686 = vmatmul.mubr.f32.gmra.mrb[0].mxu0 %v584
      %v687 = vpop.f32.mrb[0].mxu0
      %v688 = vadd.f32 %v565, %v687
      %v689 = vpop.f32.mrb[0].mxu0
      %690 = vmatprep.mubr.f32.mxu0 0.0
      %691 = vmatmul.mubr.f32.gmra.mrb[0].mxu0 %v587
      %v692 = vpop.f32.mrb[0].mxu0
      %v693 = vadd.f32 %v565, %v692
      %v694 = vpop.f32.mrb[0].mxu0
      %695 = vmatprep.mubr.f32.mxu0 0.0
      %696 = vmatmul.mubr.f32.gmra.mrb[0].mxu0 %v590
      %v697 = vpop.f32.mrb[0].mxu0
      %v698 = vadd.f32 %v565, %v697
      %v699 = vpop.f32.mrb[0].mxu0
      %700 = vdwg.mxu0
      %v701 = vxor.u32 %v663, 2147483648
      %v702 = vxor.u32 %v668, 2147483648
      %v703 = vxor.u32 %v673, 2147483648
      %v704 = vxor.u32 %v678, 2147483648
      %v705 = vxor.u32 %v683, 2147483648
      %v706 = vxor.u32 %v688, 2147483648
      %v707 = vxor.u32 %v693, 2147483648
      %v708 = vxor.u32 %v698, 2147483648
      %v709 = vmul.f32 %v701, 1.442695
      %v710 = vpow.pop %v709
      %v711 = vmul.f32 %v702, 1.442695
      %v712 = vpow.pop %v711
      %v713 = vmul.f32 %v703, 1.442695
      %v714 = vpow.pop %v713
      %v715 = vmul.f32 %v704, 1.442695
      %v716 = vpow.pop %v715
      %v717 = vmul.f32 %v705, 1.442695
      %v718 = vpow.pop %v717
      %v719 = vmul.f32 %v706, 1.442695
      %v720 = vpow.pop %v719
      %v721 = vmul.f32 %v707, 1.442695
      %v722 = vpow.pop %v721
      %v723 = vmul.f32 %v708, 1.442695
      %v724 = vpow.pop %v723
      %v725 = vadd.f32 %v710, 1.0
      %v726 = vadd.f32 %v712, 1.0
      %v727 = vadd.f32 %v714, 1.0
      %v728 = vadd.f32 %v716, 1.0
      %v729 = vadd.f32 %v718, 1.0
      %v730 = vadd.f32 %v720, 1.0
      %v731 = vadd.f32 %v722, 1.0
      %v732 = vadd.f32 %v724, 1.0
      %v733 = vrcp.pop %v725
      %v734 = vmul.f32 1.0, %v733
      %v735 = vrcp.pop %v726
      %v736 = vmul.f32 1.0, %v735
      %v737 = vrcp.pop %v727
      %v738 = vmul.f32 1.0, %v737
      %v739 = vrcp.pop %v728
      %v740 = vmul.f32 1.0, %v739
      %v741 = vrcp.pop %v729
      %v742 = vmul.f32 1.0, %v741
      %v743 = vrcp.pop %v730
      %v744 = vmul.f32 1.0, %v743
      %v745 = vrcp.pop %v731
      %v746 = vmul.f32 1.0, %v745
      %v747 = vrcp.pop %v732
      %v748 = vmul.f32 1.0, %v747
      %v749 = vld [vmem:[%s5] sm:$0xff]
      %v750 = vld [vmem:[%s5 + $0x8] sm:$0xff]
      %v751 = vld [vmem:[%s5 + $0x10] sm:$0xff]
      %v752 = vld [vmem:[%s5 + $0x18] sm:$0xff]
      %v753 = vld [vmem:[%s5 + $0x20] sm:$0xff]
      %v754 = vld [vmem:[%s5 + $0x28] sm:$0xff]
      %v755 = vld [vmem:[%s5 + $0x30] sm:$0xff]
      %v756 = vld [vmem:[%s5 + $0x38] sm:$0xff]
      %v757 = vld [vmem:[%s5 + $0x40] sm:$0xff]
      %v758 = vld [vmem:[%s5 + $0x48] sm:$0xff]
      %v759 = vld [vmem:[%s6] sm:$0x1]
      %v761 = vlaneseq
      %v762 = vshrl.u32 %v761, 7
      %v763 = vsub.s32 0, %v762
      %v764 = vrot.slane %v759, %v763
      %vm766 = vcmask 654336
      %v768 = vsel %vm766, %v734, 0
      %v771 = vsel %vm766, %v736, 0
      %v774 = vsel %vm766, %v738, 0
      %v777 = vsel %vm766, %v740, 0
      %v780 = vsel %vm766, %v742, 0
      %v783 = vsel %vm766, %v744, 0
      %v786 = vsel %vm766, %v746, 0
      %v789 = vsel %vm766, %v748, 0
      %791 = vmatprep.subr.mxu0 0.0
      %792 = vmatpush1.msra.mxu0 %v749
      %793 = vmatprep.subr.mxu0 0.0
      %794 = vmatpush1.msra.mxu0 %v750
      %795 = vmatprep.subr.mxu0 0.0
      %796 = vmatpush1.msra.mxu0 %v751
      %797 = vmatprep.subr.mxu0 0.0
      %798 = vmatpush1.msra.mxu0 %v752
      %799 = vmatprep.subr.mxu0 0.0
      %800 = vmatpush1.msra.mxu0 %v753
      %801 = vmatprep.subr.mxu0 0.0
      %802 = vmatpush1.msra.mxu0 %v754
      %803 = vmatprep.subr.mxu0 0.0
      %804 = vmatpush1.msra.mxu0 %v755
      %805 = vmatprep.subr.mxu0 0.0
      %806 = vmatpush1.msra.mxu0 %v756
      %807 = vmatprep.subr.mxu0 0.0
      %808 = vmatpush1.msra.mxu0 %v757
      %809 = vmatprep.subr.mxu0 0.0
      %810 = vmatpush1.msra.mxu0 %v758
      %811 = vmatprep.subr.mxu0 0.0
      %812 = vmatpush1.msra.mxu0 0.0
      %813 = vmatprep.subr.mxu0 0.0
      %814 = vmatpush1.msra.mxu0 0.0
      %815 = vmatprep.subr.mxu0 0.0
      %816 = vmatpush1.msra.mxu0 0.0
      %817 = vmatprep.subr.mxu0 0.0
      %818 = vmatpush1.msra.mxu0 0.0
      %819 = vmatprep.subr.mxu0 0.0
      %820 = vmatpush1.msra.mxu0 0.0
      %821 = vmatprep.subr.mxu0 0.0
      %822 = vmatpush1.msra.mxu0 0.0
      %823 = vmatprep.subr.mxu0 0.0
      %824 = vmatpush1.msra.mxu0 0.0
      %825 = vmatprep.subr.mxu0 0.0
      %826 = vmatpush1.msra.mxu0 0.0
      %827 = vmatprep.subr.mxu0 0.0
      %828 = vmatpush1.msra.mxu0 0.0
      %829 = vmatprep.subr.mxu0 0.0
      %830 = vmatpush1.msra.mxu0 0.0
      %831 = vmatprep.subr.mxu0 0.0
      %832 = vmatpush1.msra.mxu0 0.0
      %833 = vmatprep.subr.mxu0 0.0
      %834 = vmatpush1.msra.mxu0 0.0
      %835 = vmatprep.subr.mxu0 0.0
      %836 = vmatpush1.msra.mxu0 0.0
      %837 = vmatprep.subr.mxu0 0.0
      %838 = vmatpush1.msra.mxu0 0.0
      %839 = vmatprep.subr.mxu0 0.0
      %840 = vmatpush1.msra.mxu0 0.0
      %841 = vmatprep.subr.mxu0 0.0
      %842 = vmatpush1.msra.mxu0 0.0
      %843 = vmatprep.subr.mxu0 0.0
      %844 = vmatpush1.msra.mxu0 0.0
      %845 = vmatprep.subr.mxu0 0.0
      %846 = vmatpush1.msra.mxu0 0.0
      %847 = vmatprep.subr.mxu0 0.0
      %848 = vmatpush1.msra.mxu0 0.0
      %849 = vmatprep.subr.mxu0 0.0
      %850 = vmatpush1.msra.mxu0 0.0
      %851 = vmatprep.subr.mxu0 0.0
      %852 = vmatpush1.msra.mxu0 0.0
      %853 = vmatprep.subr.mxu0 0.0
      %854 = vmatpush1.msra.mxu0 0.0
      %855 = vmatprep.mubr.f32.mxu0 0.0
      %856 = vmatmul.mubr.f32.gmra.mrb[0].mxu0 %v768
      %v857 = vpop.f32.mrb[0].mxu0
      %v858 = vadd.f32 %v764, %v857
      %v859 = vpop.f32.mrb[0].mxu0
      %860 = vmatprep.mubr.f32.mxu0 0.0
      %861 = vmatmul.mubr.f32.gmra.mrb[0].mxu0 %v771
      %v862 = vpop.f32.mrb[0].mxu0
      %v863 = vadd.f32 %v764, %v862
      %v864 = vpop.f32.mrb[0].mxu0
      %865 = vmatprep.mubr.f32.mxu0 0.0
      %866 = vmatmul.mubr.f32.gmra.mrb[0].mxu0 %v774
      %v867 = vpop.f32.mrb[0].mxu0
      %v868 = vadd.f32 %v764, %v867
      %v869 = vpop.f32.mrb[0].mxu0
      %870 = vmatprep.mubr.f32.mxu0 0.0
      %871 = vmatmul.mubr.f32.gmra.mrb[0].mxu0 %v777
      %v872 = vpop.f32.mrb[0].mxu0
      %v873 = vadd.f32 %v764, %v872
      %v874 = vpop.f32.mrb[0].mxu0
      %875 = vmatprep.mubr.f32.mxu0 0.0
      %876 = vmatmul.mubr.f32.gmra.mrb[0].mxu0 %v780
      %v877 = vpop.f32.mrb[0].mxu0
      %v878 = vadd.f32 %v764, %v877
      %v879 = vpop.f32.mrb[0].mxu0
      %880 = vmatprep.mubr.f32.mxu0 0.0
      %881 = vmatmul.mubr.f32.gmra.mrb[0].mxu0 %v783
      %v882 = vpop.f32.mrb[0].mxu0
      %v883 = vadd.f32 %v764, %v882
      %v884 = vpop.f32.mrb[0].mxu0
      %885 = vmatprep.mubr.f32.mxu0 0.0
      %886 = vmatmul.mubr.f32.gmra.mrb[0].mxu0 %v786
      %v887 = vpop.f32.mrb[0].mxu0
      %v888 = vadd.f32 %v764, %v887
      %v889 = vpop.f32.mrb[0].mxu0
      %890 = vmatprep.mubr.f32.mxu0 0.0
      %891 = vmatmul.mubr.f32.gmra.mrb[0].mxu0 %v789
      %v892 = vpop.f32.mrb[0].mxu0
      %v893 = vadd.f32 %v764, %v892
      %v894 = vpop.f32.mrb[0].mxu0
      %895 = vdwg.mxu0
      %v896 = vxor.u32 %v858, 2147483648
      %v897 = vxor.u32 %v863, 2147483648
      %v898 = vxor.u32 %v868, 2147483648
      %v899 = vxor.u32 %v873, 2147483648
      %v900 = vxor.u32 %v878, 2147483648
      %v901 = vxor.u32 %v883, 2147483648
      %v902 = vxor.u32 %v888, 2147483648
      %v903 = vxor.u32 %v893, 2147483648
      %v904 = vmul.f32 %v896, 1.442695
      %v905 = vpow.pop %v904
      %v906 = vmul.f32 %v897, 1.442695
      %v907 = vpow.pop %v906
      %v908 = vmul.f32 %v898, 1.442695
      %v909 = vpow.pop %v908
      %v910 = vmul.f32 %v899, 1.442695
      %v911 = vpow.pop %v910
      %v912 = vmul.f32 %v900, 1.442695
      %v913 = vpow.pop %v912
      %v914 = vmul.f32 %v901, 1.442695
      %v915 = vpow.pop %v914
      %v916 = vmul.f32 %v902, 1.442695
      %v917 = vpow.pop %v916
      %v918 = vmul.f32 %v903, 1.442695
      %v919 = vpow.pop %v918
      %v920 = vadd.f32 %v905, 1.0
      %v921 = vadd.f32 %v907, 1.0
      %v922 = vadd.f32 %v909, 1.0
      %v923 = vadd.f32 %v911, 1.0
      %v924 = vadd.f32 %v913, 1.0
      %v925 = vadd.f32 %v915, 1.0
      %v926 = vadd.f32 %v917, 1.0
      %v927 = vadd.f32 %v919, 1.0
      %v928 = vrcp.pop %v920
      %v929 = vmul.f32 1.0, %v928
      %v930 = vrcp.pop %v921
      %v931 = vmul.f32 1.0, %v930
      %v932 = vrcp.pop %v922
      %v933 = vmul.f32 1.0, %v932
      %v934 = vrcp.pop %v923
      %v935 = vmul.f32 1.0, %v934
      %v936 = vrcp.pop %v924
      %v937 = vmul.f32 1.0, %v936
      %v938 = vrcp.pop %v925
      %v939 = vmul.f32 1.0, %v938
      %v940 = vrcp.pop %v926
      %v941 = vmul.f32 1.0, %v940
      %v942 = vrcp.pop %v927
      %v943 = vmul.f32 1.0, %v942
      %v944 = vld [vmem:[%s7] sm:$0x1]
      %v946 = vlaneseq
      %v947 = vshrl.u32 %v946, 7
      %v948 = vsub.s32 0, %v947
      %v949 = vrot.slane %v944, %v948
      %v951 = vmul.f32 %v929, %v949
      %v952 = vmul.f32 %v931, %v949
      %v953 = vmul.f32 %v933, %v949
      %v954 = vmul.f32 %v935, %v949
      %v955 = vmul.f32 %v937, %v949
      %v956 = vmul.f32 %v939, %v949
      %v957 = vmul.f32 %v941, %v949
      %v958 = vmul.f32 %v943, %v949
      %vm959 = vcmask 326656
      %v960 = vsel %vm959, %v951, 0.0
      %961 = vadd.xlane.f32.xlu0 %v960
      %v962 = vpop.xlane.xlu0 %961
      %v963 = vsel %vm959, %v952, 0.0
      %964 = vadd.xlane.f32.xlu0 %v963
      %v965 = vpop.xlane.xlu0 %964
      %v966 = vsel %vm959, %v953, 0.0
      %967 = vadd.xlane.f32.xlu0 %v966
      %v968 = vpop.xlane.xlu0 %967
      %v969 = vsel %vm959, %v954, 0.0
      %970 = vadd.xlane.f32.xlu0 %v969
      %v971 = vpop.xlane.xlu0 %970
      %v972 = vsel %vm959, %v955, 0.0
      %973 = vadd.xlane.f32.xlu0 %v972
      %v974 = vpop.xlane.xlu0 %973
      %v975 = vsel %vm959, %v956, 0.0
      %976 = vadd.xlane.f32.xlu0 %v975
      %v977 = vpop.xlane.xlu0 %976
      %v978 = vsel %vm959, %v957, 0.0
      %979 = vadd.xlane.f32.xlu0 %v978
      %v980 = vpop.xlane.xlu0 %979
      %v981 = vsel %vm959, %v958, 0.0
      %982 = vadd.xlane.f32.xlu0 %v981
      %v983 = vpop.xlane.xlu0 %982
      %v984 = vld [vmem:[#allocation2] sm:$0x1]
      %v986 = vlaneseq
      %v987 = vshrl.u32 %v986, 7
      %v988 = vsub.s32 0, %v987
      %v989 = vrot.slane %v984, %v988
      %v991 = vadd.f32 %v962, %v989
      %v992 = vadd.f32 %v965, %v989
      %v993 = vadd.f32 %v968, %v989
      %v994 = vadd.f32 %v971, %v989
      %v995 = vadd.f32 %v974, %v989
      %v996 = vadd.f32 %v977, %v989
      %v997 = vadd.f32 %v980, %v989
      %v998 = vadd.f32 %v983, %v989
      %v999 = vlaneseq
      %v1000 = vshrl.u32 %v999, 7
      %v1001 = vld [vmem:[%s364] sm:$0xff]
      %v1002 = vcombine.high %v1001, %v1001
      %v1004 = vunpack.c.l.s4 1966171168
      %v1005 = vunpack.c.0.s8 %v1004
      %v1006 = vlaneseq
      %v1007 = vshrl.u32 %v1006, 7
      %v1008 = vsub.s32 %v1005, %v1007
      %v1009 = vrot.slane %v1001, %v1008
      %v1011 = vunpack.c.l.s4 1966171168
      %v1012 = vunpack.c.0.s8 %v1011
      %v1013 = vlaneseq
      %v1014 = vshrl.u32 %v1013, 7
      %v1015 = vsub.s32 %v1012, %v1014
      %v1016 = vrot.slane %v1002, %v1015
      %v1017 = vcombine.high %v1009, %v1009
      %v1018 = vcombine.high %v1016, %v1016
      %v1020 = vunpack.c.l.s4 1966171168
      %v1021 = vunpack.c.0.s8 %v1020
      %v1022 = vlaneseq
      %v1023 = vshrl.u32 %v1022, 7
      %v1024 = vsub.s32 %v1021, %v1023
      %v1025 = vrot.slane %v1009, %v1024
      %v1027 = vunpack.c.l.s4 1966171168
      %v1028 = vunpack.c.0.s8 %v1027
      %v1029 = vlaneseq
      %v1030 = vshrl.u32 %v1029, 7
      %v1031 = vsub.s32 %v1028, %v1030
      %v1032 = vrot.slane %v1016, %v1031
      %v1034 = vunpack.c.l.s4 1966171168
      %v1035 = vunpack.c.0.s8 %v1034
      %v1036 = vlaneseq
      %v1037 = vshrl.u32 %v1036, 7
      %v1038 = vsub.s32 %v1035, %v1037
      %v1039 = vrot.slane %v1017, %v1038
      %v1041 = vunpack.c.l.s4 1966171168
      %v1042 = vunpack.c.0.s8 %v1041
      %v1043 = vlaneseq
      %v1044 = vshrl.u32 %v1043, 7
      %v1045 = vsub.s32 %v1042, %v1044
      %v1046 = vrot.slane %v1018, %v1045
      %v1047 = vcombine.high %v1025, %v1025
      %v1048 = vcombine.high %v1032, %v1032
      %v1049 = vcombine.high %v1039, %v1039
      %v1050 = vcombine.high %v1046, %v1046
      %v1051 = vlaneseq
      %v1052 = vshrl.u32 %v1051, 7
      %v1053 = vsub.s32 0, %v1052
      %v1054 = vrot.slane %v1025, %v1053
      %v1055 = vlaneseq
      %v1056 = vshrl.u32 %v1055, 7
      %v1057 = vsub.s32 0, %v1056
      %v1058 = vrot.slane %v1039, %v1057
      %v1059 = vlaneseq
      %v1060 = vshrl.u32 %v1059, 7
      %v1061 = vsub.s32 0, %v1060
      %v1062 = vrot.slane %v1047, %v1061
      %v1063 = vlaneseq
      %v1064 = vshrl.u32 %v1063, 7
      %v1065 = vsub.s32 0, %v1064
      %v1066 = vrot.slane %v1049, %v1065
      %v1067 = vlaneseq
      %v1068 = vshrl.u32 %v1067, 7
      %v1069 = vsub.s32 0, %v1068
      %v1070 = vrot.slane %v1032, %v1069
      %v1071 = vlaneseq
      %v1072 = vshrl.u32 %v1071, 7
      %v1073 = vsub.s32 0, %v1072
      %v1074 = vrot.slane %v1046, %v1073
      %v1075 = vlaneseq
      %v1076 = vshrl.u32 %v1075, 7
      %v1077 = vsub.s32 0, %v1076
      %v1078 = vrot.slane %v1048, %v1077
      %v1079 = vlaneseq
      %v1080 = vshrl.u32 %v1079, 7
      %v1081 = vsub.s32 0, %v1080
      %v1082 = vrot.slane %v1050, %v1081
      %vm1083 = vcmp.lt.s32.totalorder %v1000, %v1054
      %vm1084 = vcmp.lt.s32.totalorder %v1000, %v1058
      %vm1085 = vcmp.lt.s32.totalorder %v1000, %v1062
      %vm1086 = vcmp.lt.s32.totalorder %v1000, %v1066
      %vm1087 = vcmp.lt.s32.totalorder %v1000, %v1070
      %vm1088 = vcmp.lt.s32.totalorder %v1000, %v1074
      %vm1089 = vcmp.lt.s32.totalorder %v1000, %v1078
      %vm1090 = vcmp.lt.s32.totalorder %v1000, %v1082
      %v1091 = vsel %vm1083, %v991, 0.0
      %v1092 = vsel %vm1084, %v992, 0.0
      %v1093 = vsel %vm1085, %v993, 0.0
      %v1094 = vsel %vm1086, %v994, 0.0
      %v1095 = vsel %vm1087, %v995, 0.0
      %v1096 = vsel %vm1088, %v996, 0.0
      %v1097 = vsel %vm1089, %v997, 0.0
      %v1098 = vsel %vm1090, %v998, 0.0
      %1100 = vset.pattern.permute.xlu0 0
      %1101 = vperm.xlu0 %1100, %v1091
      %v1102 = vpop.permute.xlu0 %1101
      %1105 = vset.pattern.permute.xlu0 0
      %1106 = vperm.xlu0 %1105, %v1092
      %v1107 = vpop.permute.xlu0 %1106
      %1110 = vset.pattern.permute.xlu0 0
      %1111 = vperm.xlu0 %1110, %v1093
      %v1112 = vpop.permute.xlu0 %1111
      %1115 = vset.pattern.permute.xlu0 0
      %1116 = vperm.xlu0 %1115, %v1094
      %v1117 = vpop.permute.xlu0 %1116
      %1120 = vset.pattern.permute.xlu0 0
      %1121 = vperm.xlu0 %1120, %v1095
      %v1122 = vpop.permute.xlu0 %1121
      %1125 = vset.pattern.permute.xlu0 0
      %1126 = vperm.xlu0 %1125, %v1096
      %v1127 = vpop.permute.xlu0 %1126
      %1130 = vset.pattern.permute.xlu0 0
      %1131 = vperm.xlu0 %1130, %v1097
      %v1132 = vpop.permute.xlu0 %1131
      %1135 = vset.pattern.permute.xlu0 0
      %1136 = vperm.xlu0 %1135, %v1098
      %v1137 = vpop.permute.xlu0 %1136
      %v1139 = vmul.f32 %v1102, %v370
      %v1140 = vmul.f32 %v1107, %v371
      %v1141 = vmul.f32 %v1112, %v372
      %v1142 = vmul.f32 %v1117, %v373
      %v1143 = vmul.f32 %v1122, %v374
      %v1144 = vmul.f32 %v1127, %v375
      %v1145 = vmul.f32 %v1132, %v376
      %v1146 = vmul.f32 %v1137, %v377
      %v1147 = vsel %vm540, %v1139, 0.0
      %v1148 = vrot.slane %v1147, 4
      %v1149 = vadd.f32 %v1147, %v1148
      %v1150 = vrot.slane %v1149, 2
      %v1151 = vadd.f32 %v1149, %v1150
      %v1152 = vrot.slane %v1151, 1
      %v1153 = vadd.f32 %v1151, %v1152
      %v1154 = vsel %vm540, %v1140, 0.0
      %v1155 = vrot.slane %v1154, 4
      %v1156 = vadd.f32 %v1154, %v1155
      %v1157 = vrot.slane %v1156, 2
      %v1158 = vadd.f32 %v1156, %v1157
      %v1159 = vrot.slane %v1158, 1
      %v1160 = vadd.f32 %v1158, %v1159
      %v1161 = vsel %vm540, %v1141, 0.0
      %v1162 = vrot.slane %v1161, 4
      %v1163 = vadd.f32 %v1161, %v1162
      %v1164 = vrot.slane %v1163, 2
      %v1165 = vadd.f32 %v1163, %v1164
      %v1166 = vrot.slane %v1165, 1
      %v1167 = vadd.f32 %v1165, %v1166
      %v1168 = vsel %vm540, %v1142, 0.0
      %v1169 = vrot.slane %v1168, 4
      %v1170 = vadd.f32 %v1168, %v1169
      %v1171 = vrot.slane %v1170, 2
      %v1172 = vadd.f32 %v1170, %v1171
      %v1173 = vrot.slane %v1172, 1
      %v1174 = vadd.f32 %v1172, %v1173
      %v1175 = vsel %vm540, %v1143, 0.0
      %v1176 = vrot.slane %v1175, 4
      %v1177 = vadd.f32 %v1175, %v1176
      %v1178 = vrot.slane %v1177, 2
      %v1179 = vadd.f32 %v1177, %v1178
      %v1180 = vrot.slane %v1179, 1
      %v1181 = vadd.f32 %v1179, %v1180
      %v1182 = vsel %vm540, %v1144, 0.0
      %v1183 = vrot.slane %v1182, 4
      %v1184 = vadd.f32 %v1182, %v1183
      %v1185 = vrot.slane %v1184, 2
      %v1186 = vadd.f32 %v1184, %v1185
      %v1187 = vrot.slane %v1186, 1
      %v1188 = vadd.f32 %v1186, %v1187
      %v1189 = vsel %vm540, %v1145, 0.0
      %v1190 = vrot.slane %v1189, 4
      %v1191 = vadd.f32 %v1189, %v1190
      %v1192 = vrot.slane %v1191, 2
      %v1193 = vadd.f32 %v1191, %v1192
      %v1194 = vrot.slane %v1193, 1
      %v1195 = vadd.f32 %v1193, %v1194
      %v1196 = vsel %vm540, %v1146, 0.0
      %v1197 = vrot.slane %v1196, 4
      %v1198 = vadd.f32 %v1196, %v1197
      %v1199 = vrot.slane %v1198, 2
      %v1200 = vadd.f32 %v1198, %v1199
      %v1201 = vrot.slane %v1200, 1
      %v1202 = vadd.f32 %v1200, %v1201
      %vm1211 = vcmask 1041409
      %v1212 = vsel %vm1211, %v1160, %v1153
      %vm1213 = vcmask 1042434
      %v1214 = vsel %vm1213, %v1167, %v1212
      %vm1215 = vcmask 1043459
      %v1216 = vsel %vm1215, %v1174, %v1214
      %vm1217 = vcmask 1044484
      %v1218 = vsel %vm1217, %v1181, %v1216
      %vm1219 = vcmask 1045509
      %v1220 = vsel %vm1219, %v1188, %v1218
      %vm1221 = vcmask 1046534
      %v1222 = vsel %vm1221, %v1195, %v1220
      %vm1223 = vcmask 1047559
      %v1224 = vsel %vm1223, %v1202, %v1222
      %1226 = vst.msk [vmem:[%s368] sm:$0xff] %vm540, %v1224
      %p1227 = scmp.lt.s32.totalorder %s22, 1
      %s1228 = scalar_select %p1227, %s22, 1
      %s1229 = smul.addr %s1228, 8
      %s1230 = scalar_lea.vmem %s9, %s1229
      // Predicated region
      $region57: #{tpu_custom_call.1} parent=55 // pred_check
        %p1231 = pneg %p244
      $region58: #{tpu_custom_call.1} parent=55 // pred_check_branch
        %1233 = sbr.rel (%p1231) target = $region60
      $region59: #{tpu_custom_call.1} parent=55 // pred_region
        _
      $region60: #{tpu_custom_call.1} parent=55 // pred_fallthru
        _
    $region56: #{tpu_custom_call.1} parent=5 // pred_fallthru
      _
    %p1234 = scmp.le.s32.totalorder 2, %s17
    // Predicated region
    $region61: #{tpu_custom_call.1} parent=5 // pred_check
      %p1235 = pneg %p1234
    $region62: #{tpu_custom_call.1} parent=5 // pred_check_branch
      %1237 = sbr.rel (%p1235) target = $region64
    $region63: #{tpu_custom_call.1} parent=5 // pred_region
      %s1238 = ssub.s32 %s17, 2
      // Predicated region
      $region65: #{tpu_custom_call.1} parent=63 // pred_check
        %p1239 = pneg %p250
      $region66: #{tpu_custom_call.1} parent=63 // pred_check_branch
        %1241 = sbr.rel (%p1239) target = $region68
      $region67: #{tpu_custom_call.1} parent=63 // pred_region
        %p1242 = scmp.lt.s32.totalorder %s23, 1
        %s1243 = scalar_select %p1242, %s23, 1
        %s1244 = smul.addr %s1243, 8
        %s1245 = scalar_lea.vmem %s9, %s1244
      $region68: #{tpu_custom_call.1} parent=63 // pred_fallthru
        _
    $region64: #{tpu_custom_call.1} parent=5 // pred_fallthru
      _
  $region6: #{tpu_custom_call.1} parent=0 // loop_footer
    %s21 = sadd.s32 1, %s17
  $region7: #{tpu_custom_call.1} parent=0 // loop_footer_branch
    %16 = sbr.rel target = $region3
  $region8: #{tpu_custom_call.1} parent=0 // loop_exit
    _

</llo_original>
